<compile_context>
chip_gen: v5e
topology: v5e:2x2
jax: 0.10.0
libtpu: 0.0.40
codegen_flags: <defaults>
</compile_context>

<pallas_src>
import jax
import jax.numpy as jnp
from jax import lax
from jax.experimental import pallas as pl
from jax.experimental.pallas import tpu as pltpu

_EPS = 1e-5
_LANES = 128
_SUBLANES = 8
_TILE_BYTES_TARGET = 4 << 20          # ~4 MiB of input per row tile
_MAX_TM = 8192                        # cap on packed-row tile
_VMEM_LIMIT_BYTES = 48 * 1024 * 1024  # < v7x 64 MiB physical, fine on v5e/v6e


def _split_bf16(v):
    """Two-term bf16 split of an f32 array: v ~= hi + lo (rel err ~2^-18)."""
    hi = v.astype(jnp.bfloat16)
    lo = (v - hi.astype(jnp.float32)).astype(jnp.bfloat16)
    return hi, lo


def _ln_packed_kernel(x_ref, w_ref, b_ref, r_ref, o_ref):
    """Lane-packed LayerNorm: each 128-lane row holds k tokens of C channels.

    r_ref is a (D, D) bf16 block-diagonal matrix with 1/C inside each CxC
    block, so (x @ r) is the per-token mean already broadcast across that
    token's C lanes.  Stats use two single-pass bf16 MXU matmuls each (hi/lo
    split) with fp32 accumulation; everything stays lane-dense (no masked
    stores, no in-kernel relayout) and the math is row/segment independent,
    so OOB rows in a partial last block cannot affect real tokens.
    """
    x = x_ref[...].astype(jnp.float32)            # (tm, D)
    r = r_ref[...]                                # (D, D) bf16, block-diag 1/C

    def seg_mean(v):                              # broadcast per-token mean
        hi, lo = _split_bf16(v)
        return (jnp.dot(hi, r, preferred_element_type=jnp.float32)
                + jnp.dot(lo, r, preferred_element_type=jnp.float32))

    mu = seg_mean(x)
    xc = x - mu
    var = jnp.maximum(seg_mean(xc * xc), 0.0)     # two-pass population variance
    inv = lax.rsqrt(var + _EPS)
    y = xc * inv * w_ref[...].astype(jnp.float32) + b_ref[...].astype(jnp.float32)
    o_ref[...] = y.astype(o_ref.dtype)


def _ln_simple_kernel(x_ref, w_ref, b_ref, o_ref):
    """Fallback for C >= 128 or C not dividing 128 (XLU reductions)."""
    x = x_ref[...].astype(jnp.float32)
    mu = jnp.mean(x, axis=-1, keepdims=True)
    xc = x - mu
    var = jnp.mean(xc * xc, axis=-1, keepdims=True)
    inv = lax.rsqrt(var + _EPS)
    y = xc * inv * w_ref[...].astype(jnp.float32) + b_ref[...].astype(jnp.float32)
    o_ref[...] = y.astype(o_ref.dtype)


def _row_dim_semantics(grid_m):
    # v7x has two TensorCores sharing ~3.2 TB/s HBM: shard the row grid across
    # them.  Single-TC chips (v5e/v6e) keep plain "parallel".
    if grid_m >= 2:
        try:
            kind = jax.devices()[0].device_kind.lower()
        except Exception:
            kind = ""
        if "v7" in kind or "7x" in kind:
            return (pltpu.CORE_PARALLEL,)
    return ("parallel",)


def withbias_layernorm(x, weight, bias, *, block_rows=None):
    """LayerNorm over the last dim with affine (weight, bias), eps=1e-5."""
    orig_shape = x.shape
    C = orig_shape[-1]
    assert weight.shape == (C,) and bias.shape == (C,)

    rows = 1
    for d in orig_shape[:-1]:
        rows *= d
    x2 = x.reshape(rows, C)

    # Lane packing factor: k tokens per 128-lane row (D = k*C = 128).
    k = _LANES // C if (C < _LANES and _LANES % C == 0) else 1
    D = k * C

    # Minimal pad: only the rows % k remainder (< k rows).  Aligned inputs are
    # untouched -> no pad / slice copies around the memory-bound kernel.
    rem = rows % k
    rows_pad = rows + (k - rem if rem else 0)
    if rows_pad != rows:
        x2 = jnp.pad(x2, ((0, rows_pad - rows), (0, 0)))
    packed_rows = rows_pad // k
    xp = x2.reshape(packed_rows, D)               # free (row-major) reshape

    # Row tile: ~_TILE_BYTES_TARGET of input per tile, multiple of 8 sublanes.
    itemsize = x.dtype.itemsize
    tm = _TILE_BYTES_TARGET // max(D * itemsize, 1)
    tm = max(_SUBLANES, min(_MAX_TM, (tm // _SUBLANES) * _SUBLANES))
    if block_rows is not None:                    # test / tuning override
        tm = max(_SUBLANES, (int(block_rows) // _SUBLANES) * _SUBLANES)
    if tm >= packed_rows:
        tm = packed_rows                          # single step, block == array
    grid_m = pl.cdiv(packed_rows, tm)             # last block may be partial

    # Parameters replicated across the k packed tokens (lanes repeat every C).
    w2 = jnp.tile(weight.reshape(1, C), (1, k))
    b2 = jnp.tile(bias.reshape(1, C), (1, k))

    row_spec = pl.BlockSpec((tm, D), lambda i: (i, 0))
    par_spec = pl.BlockSpec((1, D), lambda i: (0, 0))

    if k > 1:
        # Block-diagonal 1/C reduction matrix; 1/C is exact in bf16 (C is a
        # power of two here), so the bf16 matmuls lose nothing on r's side.
        seg = jnp.arange(D, dtype=jnp.int32) // C
        rmat = jnp.where(seg[:, None] == seg[None, :],
                         jnp.float32(1.0 / C),
                         jnp.float32(0.0)).astype(jnp.bfloat16)
        kernel = _ln_packed_kernel
        in_specs = [row_spec, par_spec, par_spec,
                    pl.BlockSpec((D, D), lambda i: (0, 0))]
        args = (xp, w2, b2, rmat)
    else:
        kernel = _ln_simple_kernel
        in_specs = [row_spec, par_spec, par_spec]
        args = (xp, w2, b2)

    out = pl.pallas_call(
        kernel,
        out_shape=jax.ShapeDtypeStruct((packed_rows, D), x.dtype),
        grid_spec=pltpu.PrefetchScalarGridSpec(
            num_scalar_prefetch=0,
            grid=(grid_m,),
            in_specs=in_specs,
            out_specs=row_spec,
        ),
        compiler_params=pltpu.CompilerParams(
            dimension_semantics=_row_dim_semantics(grid_m),
            vmem_limit_bytes=_VMEM_LIMIT_BYTES,
        ),
    )(*args)

    out = out.reshape(rows_pad, C)
    if rows_pad != rows:
        out = out[:rows]
    return out.reshape(orig_shape)


def _reference_layernorm(x, weight, bias):
    x32 = x.astype(jnp.float32)
    mu = jnp.mean(x32, axis=-1, keepdims=True)
    var = jnp.mean((x32 - mu) ** 2, axis=-1, keepdims=True)
    return ((x32 - mu) / jnp.sqrt(var + _EPS) * weight + bias).astype(x.dtype)


if __name__ == "__main__":
    key = jax.random.PRNGKey(0)

    # Shapes consistent with the ViT depth decoder: (B, N, C), LayerNorm over C.
    B, N, C = 2, 64, 32
    x = jax.random.normal(key, (B, N, C), dtype=jnp.float32)
    weight = jnp.ones((C,), jnp.float32)   # matches nn.Parameter(torch.ones)
    bias = jnp.zeros((C,), jnp.float32)    # matches nn.Parameter(torch.zeros)

    y = jax.block_until_ready(withbias_layernorm(x, weight, bias))
    assert jnp.allclose(y, _reference_layernorm(x, weight, bias),
                        atol=1e-4, rtol=1e-4), "mismatch (packed, single tile)"

    # Force a multi-step grid with a partial last block (no-pad aligned path).
    y_mt = jax.block_until_ready(withbias_layernorm(x, weight, bias, block_rows=56))
    assert jnp.allclose(y_mt, _reference_layernorm(x, weight, bias),
                        atol=1e-4, rtol=1e-4), "mismatch (packed, multi tile)"

    # Ragged row count (rows % k != 0) -> minimal pad + partial last block.
    x2 = jax.random.normal(jax.random.PRNGKey(1), (3, 37, C), dtype=jnp.float32)
    w2 = jax.random.normal(jax.random.PRNGKey(2), (C,), dtype=jnp.float32)
    b2 = jax.random.normal(jax.random.PRNGKey(3), (C,), dtype=jnp.float32)
    y2 = jax.block_until_ready(withbias_layernorm(x2, w2, b2, block_rows=8))
    assert jnp.allclose(y2, _reference_layernorm(x2, w2, b2),
                        atol=1e-4, rtol=1e-4), "mismatch (packed, ragged rows)"

    # bf16 input, k = 2 packing, large DC offset (exercises two-pass variance).
    x3 = (jax.random.normal(jax.random.PRNGKey(4), (2, 33, 64), jnp.float32)
          + 8.0).astype(jnp.bfloat16)
    w3 = jax.random.normal(jax.random.PRNGKey(5), (64,), dtype=jnp.float32)
    b3 = jax.random.normal(jax.random.PRNGKey(6), (64,), dtype=jnp.float32)
    y3 = jax.block_until_ready(withbias_layernorm(x3, w3, b3))
    assert jnp.allclose(y3.astype(jnp.float32),
                        _reference_layernorm(x3, w3, b3).astype(jnp.float32),
                        atol=5e-2, rtol=5e-2), "mismatch (bf16, k=2 packing)"

    # C that does not divide 128 -> lane-sparse fallback kernel.
    x4 = jax.random.normal(jax.random.PRNGKey(7), (1, 50, 48), dtype=jnp.float32)
    w4 = jnp.ones((48,), jnp.float32)
    b4 = jnp.zeros((48,), jnp.float32)
    y4 = jax.block_until_ready(withbias_layernorm(x4, w4, b4))
    assert jnp.allclose(y4, _reference_layernorm(x4, w4, b4),
                        atol=1e-4, rtol=1e-4), "mismatch (fallback path)"

    print("KERNEL_OK")
</pallas_src>

<mosaic_0001>
module attributes {stable_mosaic.version = 11 : i64} {
  func.func @_ln_packed_kernel(%arg0: i32, %arg1: memref<32x128xf32, #tpu.memory_space<vmem>>, %arg2: memref<1x128xf32, #tpu.memory_space<vmem>>, %arg3: memref<1x128xf32, #tpu.memory_space<vmem>>, %arg4: memref<128x128xbf16, #tpu.memory_space<vmem>>, %arg5: memref<32x128xf32, #tpu.memory_space<vmem>>) attributes {dimension_semantics = [#tpu.dimension_semantics<parallel>], iteration_bounds = array<i64: 1>, scalar_prefetch = 0 : i64, scratch_operands = 0 : i64, tpu.core_type = #tpu.core_type<tc>, window_params = [{transform_indices = @transform_0, window_bounds = array<i64: 32, 128>}, {pipeline_mode = #tpu.pipeline_mode<synchronous>, transform_indices = @transform_1, window_bounds = array<i64: 1, 128>}, {pipeline_mode = #tpu.pipeline_mode<synchronous>, transform_indices = @transform_2, window_bounds = array<i64: 1, 128>}, {pipeline_mode = #tpu.pipeline_mode<synchronous>, transform_indices = @transform_3, window_bounds = array<i64: 128, 128>}, {transform_indices = @transform_4, window_bounds = array<i64: 32, 128>}]} {
    %c0 = arith.constant 0 : index
    %c0_0 = arith.constant 0 : index
    %0 = vector.load %arg1[%c0, %c0_0] : memref<32x128xf32, #tpu.memory_space<vmem>>, vector<32x128xf32>
    %c0_1 = arith.constant 0 : index
    %c0_2 = arith.constant 0 : index
    %1 = vector.load %arg4[%c0_1, %c0_2] : memref<128x128xbf16, #tpu.memory_space<vmem>>, vector<128x128xbf16>
    %2 = arith.truncf %0 : vector<32x128xf32> to vector<32x128xbf16>
    %3 = arith.extf %2 : vector<32x128xbf16> to vector<32x128xf32>
    %4 = arith.subf %0, %3 : vector<32x128xf32>
    %5 = arith.truncf %4 : vector<32x128xf32> to vector<32x128xbf16>
    %cst = arith.constant dense<0.000000e+00> : vector<32x128xf32>
    %6 = tpu.matmul %2, %1, %cst {dimension_numbers = #tpu.dot_dimension_numbers<[1], [0], [0], [1], [0, 0, 1, 1], [], []>} : vector<32x128xbf16>, vector<128x128xbf16>, vector<32x128xf32> -> vector<32x128xf32>
    %cst_3 = arith.constant dense<0.000000e+00> : vector<32x128xf32>
    %7 = tpu.matmul %5, %1, %cst_3 {dimension_numbers = #tpu.dot_dimension_numbers<[1], [0], [0], [1], [0, 0, 1, 1], [], []>} : vector<32x128xbf16>, vector<128x128xbf16>, vector<32x128xf32> -> vector<32x128xf32>
    %8 = arith.addf %6, %7 : vector<32x128xf32>
    %9 = arith.subf %0, %8 : vector<32x128xf32>
    %10 = arith.mulf %9, %9 : vector<32x128xf32>
    %11 = arith.truncf %10 : vector<32x128xf32> to vector<32x128xbf16>
    %12 = arith.extf %11 : vector<32x128xbf16> to vector<32x128xf32>
    %13 = arith.subf %10, %12 : vector<32x128xf32>
    %14 = arith.truncf %13 : vector<32x128xf32> to vector<32x128xbf16>
    %cst_4 = arith.constant dense<0.000000e+00> : vector<32x128xf32>
    %15 = tpu.matmul %11, %1, %cst_4 {dimension_numbers = #tpu.dot_dimension_numbers<[1], [0], [0], [1], [0, 0, 1, 1], [], []>} : vector<32x128xbf16>, vector<128x128xbf16>, vector<32x128xf32> -> vector<32x128xf32>
    %cst_5 = arith.constant dense<0.000000e+00> : vector<32x128xf32>
    %16 = tpu.matmul %14, %1, %cst_5 {dimension_numbers = #tpu.dot_dimension_numbers<[1], [0], [0], [1], [0, 0, 1, 1], [], []>} : vector<32x128xbf16>, vector<128x128xbf16>, vector<32x128xf32> -> vector<32x128xf32>
    %17 = arith.addf %15, %16 : vector<32x128xf32>
    %cst_6 = arith.constant 0.000000e+00 : f32
    %18 = vector.broadcast %cst_6 : f32 to vector<32x128xf32>
    %19 = arith.maximumf %17, %18 : vector<32x128xf32>
    %cst_7 = arith.constant 9.99999974E-6 : f32
    %20 = vector.broadcast %cst_7 : f32 to vector<32x128xf32>
    %21 = arith.addf %19, %20 : vector<32x128xf32>
    %22 = math.rsqrt %21 : vector<32x128xf32>
    %23 = arith.mulf %9, %22 : vector<32x128xf32>
    %c0_8 = arith.constant 0 : index
    %c0_9 = arith.constant 0 : index
    %24 = vector.load %arg2[%c0_8, %c0_9] : memref<1x128xf32, #tpu.memory_space<vmem>>, vector<1x128xf32>
    %25 = vector.broadcast %24 : vector<1x128xf32> to vector<32x128xf32>
    %26 = arith.mulf %23, %25 : vector<32x128xf32>
    %c0_10 = arith.constant 0 : index
    %c0_11 = arith.constant 0 : index
    %27 = vector.load %arg3[%c0_10, %c0_11] : memref<1x128xf32, #tpu.memory_space<vmem>>, vector<1x128xf32>
    %28 = vector.broadcast %27 : vector<1x128xf32> to vector<32x128xf32>
    %29 = arith.addf %26, %28 : vector<32x128xf32>
    %c0_12 = arith.constant 0 : index
    %c0_13 = arith.constant 0 : index
    %30 = vector.load %arg5[%c0_12, %c0_13] : memref<32x128xf32, #tpu.memory_space<vmem>>, vector<32x128xf32>
    tpu.vector_store %arg5[%c0_12, %c0_13], %29 {strides = array<i32>} : memref<32x128xf32, #tpu.memory_space<vmem>>, vector<32x128xf32>,
    return
  }
  func.func @transform_0(%arg0: i32) -> (i32, i32) {
    %c0_i32 = arith.constant 0 : i32
    %c0_i32_0 = arith.constant 0 : i32
    return %arg0, %c0_i32 : i32, i32
  }
  func.func @transform_1(%arg0: i32) -> (i32, i32) {
    %c0_i32 = arith.constant 0 : i32
    %c0_i32_0 = arith.constant 0 : i32
    %c0_i32_1 = arith.constant 0 : i32
    return %c0_i32, %c0_i32_0 : i32, i32
  }
  func.func @transform_2(%arg0: i32) -> (i32, i32) {
    %c0_i32 = arith.constant 0 : i32
    %c0_i32_0 = arith.constant 0 : i32
    %c0_i32_1 = arith.constant 0 : i32
    return %c0_i32, %c0_i32_0 : i32, i32
  }
  func.func @transform_3(%arg0: i32) -> (i32, i32) {
    %c0_i32 = arith.constant 0 : i32
    %c0_i32_0 = arith.constant 0 : i32
    %c0_i32_1 = arith.constant 0 : i32
    return %c0_i32, %c0_i32_0 : i32, i32
  }
  func.func @transform_4(%arg0: i32) -> (i32, i32) {
    %c0_i32 = arith.constant 0 : i32
    %c0_i32_0 = arith.constant 0 : i32
    return %arg0, %c0_i32 : i32, i32
  }
}

</mosaic_0001>

<llo_original>
// kernel: tpu_custom_call.1
$region0: #{tpu_custom_call.1}
  #allocation0 [shape = 'u32[]', space=smem, size = 0x4, offset = 0x4, fixed_abs, tag = 'smem constant byte address 0x4 - core index']
  #allocation1 [shape = 'u32[72,128]{1,0:T(1,128)}', space=vmem, size = 0x9000, scoped, tag = 'internal scratch']
  %s0 = inlined_call_operand.hbm [shape: f32[32,128], index: 0, kind: input, shape index: {}]
  %s1 = inlined_call_operand.hbm [shape: f32[1,128], index: 1, kind: input, shape index: {}]
  %s2 = inlined_call_operand.vmem [shape: f32[1,128], index: 2, kind: input, shape index: {}]
  %s3 = inlined_call_operand.hbm [shape: bf16[128,128], index: 3, kind: input, shape index: {}]
  %s4 = inlined_call_operand.hbm [shape: f32[32,128], index: 4, kind: output, shape index: {}]
  %s5 = sld [smem:[#allocation0]]
  $region38: #{tpu_custom_call.1} parent=0
    _
  %s7 = ssub.s32 1, %s5
  %s8 = scalar_select 0, %s7, %s5
  $region1: #{tpu_custom_call.1} parent=0
    #allocation2 [shape = 'u8[16384]{0}', space=vmem, size = 0x4000, scoped, tag = 'input window, operand 0, single buffered']
    #allocation3 [shape = 's32[1]{0}', space=sflag, size = 0x4, scoped, tag = 'scoped memory for tpu_custom_call.1']
    #allocation4 [shape = 's32[1]{0}', space=sflag, size = 0x4, scoped, tag = 'scoped memory for tpu_custom_call.1']
    #allocation5 [shape = 'u8[512]{0}', space=vmem, size = 0x400, scoped, tag = 'input window, operand 1, single buffered']
    #allocation6 [shape = 's32[1]{0}', space=sflag, size = 0x4, scoped, tag = 'scoped memory for tpu_custom_call.1']
    #allocation7 [shape = 'u8[32768]{0}', space=vmem, size = 0x8000, scoped, tag = 'input window, operand 3, single buffered']
    #allocation8 [shape = 'u8[16384]{0}', space=vmem, size = 0x4000, scoped, tag = 'output window, operand 0, single buffered']
    %9 = vsyncpa [#allocation3], 0
    %10 = vsyncpa [#allocation6], 0
    %11 = vsyncpa [#allocation4], 0
    // Predicated region
    $region2: #{tpu_custom_call.1} parent=1 // pred_check
      _
    $region3: #{tpu_custom_call.1} parent=1 // pred_check_branch
      %13 = sbr.rel (0) target = $region5
    $region4: #{tpu_custom_call.1} parent=1 // pred_region
      %15 = vsyncadd [#allocation3], 0
      %s16 = sshll.u32 %s0, 4
      %s17 = int_to_ptr.hbm [resolvable:$true] %s16
      %s18 = sshll.u32 [#allocation2], 4
      %s19 = int_to_ptr.vmem [resolvable:$true] %s18
      %24 = dma.hbm_to_vmem [thread:$0]  %s17, 512, %s19, [#allocation3], 128, 128, 8
    $region5: #{tpu_custom_call.1} parent=1 // pred_fallthru
      _
    // Predicated region
    $region6: #{tpu_custom_call.1} parent=1 // pred_check
      _
    $region7: #{tpu_custom_call.1} parent=1 // pred_check_branch
      %26 = sbr.rel (0) target = $region9
    $region8: #{tpu_custom_call.1} parent=1 // pred_region
      %28 = vsyncadd [#allocation6], 0
      %s30 = sshll.u32 %s1, 4
      %s31 = int_to_ptr.hbm [resolvable:$true] %s30
      %s32 = sshll.u32 [#allocation5], 4
      %s33 = int_to_ptr.vmem [resolvable:$true] %s32
      %35 = dma.hbm_to_vmem [thread:$0]  %s31, 16, %s33, [#allocation6]
    $region9: #{tpu_custom_call.1} parent=1 // pred_fallthru
      _
    // Predicated region
    $region10: #{tpu_custom_call.1} parent=1 // pred_check
      _
    $region11: #{tpu_custom_call.1} parent=1 // pred_check_branch
      %37 = sbr.rel (0) target = $region13
    $region12: #{tpu_custom_call.1} parent=1 // pred_region
      _
    $region13: #{tpu_custom_call.1} parent=1 // pred_fallthru
      _
    // Predicated region
    $region14: #{tpu_custom_call.1} parent=1 // pred_check
      _
    $region15: #{tpu_custom_call.1} parent=1 // pred_check_branch
      %39 = sbr.rel (0) target = $region17
    $region16: #{tpu_custom_call.1} parent=1 // pred_region
      %41 = vsyncadd [#allocation6], 0
      %s42 = sshll.u32 %s3, 4
      %s43 = int_to_ptr.hbm [resolvable:$true] %s42
      %s44 = sshll.u32 [#allocation7], 4
      %s45 = int_to_ptr.vmem [resolvable:$true] %s44
      %50 = dma.hbm_to_vmem [thread:$0]  %s43, 1024, %s45, [#allocation6], 64, 64, 4
    $region17: #{tpu_custom_call.1} parent=1 // pred_fallthru
      _
    // Predicated region
    $region18: #{tpu_custom_call.1} parent=1 // pred_check
      _
    $region19: #{tpu_custom_call.1} parent=1 // pred_check_branch
      %52 = sbr.rel (0) target = $region21
    $region20: #{tpu_custom_call.1} parent=1 // pred_region
      %54 = dma.done [#allocation3], 512
    $region21: #{tpu_custom_call.1} parent=1 // pred_fallthru
      _
    // Predicated region
    $region22: #{tpu_custom_call.1} parent=1 // pred_check
      _
    $region23: #{tpu_custom_call.1} parent=1 // pred_check_branch
      %56 = sbr.rel (0) target = $region25
    $region24: #{tpu_custom_call.1} parent=1 // pred_region
      %58 = dma.done [#allocation6], 16
    $region25: #{tpu_custom_call.1} parent=1 // pred_fallthru
      _
    // Predicated region
    $region26: #{tpu_custom_call.1} parent=1 // pred_check
      _
    $region27: #{tpu_custom_call.1} parent=1 // pred_check_branch
      %60 = sbr.rel (0) target = $region29
    $region28: #{tpu_custom_call.1} parent=1 // pred_region
      %62 = dma.done [#allocation6], 1024
    $region29: #{tpu_custom_call.1} parent=1 // pred_fallthru
      _
    %v63 = vld [vmem:[#allocation2] sm:$0xff]
    %v64 = vld [vmem:[#allocation2 + $0x8] sm:$0xff]
    %v65 = vld [vmem:[#allocation2 + $0x10] sm:$0xff]
    %v66 = vld [vmem:[#allocation2 + $0x18] sm:$0xff]
    %v67 = vld [vmem:[#allocation7] sm:$0xf]
    %v68 = vld [vmem:[#allocation7 + $0x4] sm:$0xf]
    %v69 = vld [vmem:[#allocation7 + $0x8] sm:$0xf]
    %v70 = vld [vmem:[#allocation7 + $0xc] sm:$0xf]
    %v71 = vld [vmem:[#allocation7 + $0x10] sm:$0xf]
    %v72 = vld [vmem:[#allocation7 + $0x14] sm:$0xf]
    %v73 = vld [vmem:[#allocation7 + $0x18] sm:$0xf]
    %v74 = vld [vmem:[#allocation7 + $0x1c] sm:$0xf]
    %v75 = vld [vmem:[#allocation7 + $0x20] sm:$0xf]
    %v76 = vld [vmem:[#allocation7 + $0x24] sm:$0xf]
    %v77 = vld [vmem:[#allocation7 + $0x28] sm:$0xf]
    %v78 = vld [vmem:[#allocation7 + $0x2c] sm:$0xf]
    %v79 = vld [vmem:[#allocation7 + $0x30] sm:$0xf]
    %v80 = vld [vmem:[#allocation7 + $0x34] sm:$0xf]
    %v81 = vld [vmem:[#allocation7 + $0x38] sm:$0xf]
    %v82 = vld [vmem:[#allocation7 + $0x3c] sm:$0xf]
    %v83 = vpack.c.bf16 %v63, %v63
    %v84 = vpack.c.bf16 %v64, %v64
    %v85 = vpack.c.bf16 %v65, %v65
    %v86 = vpack.c.bf16 %v66, %v66
    %v87 = vunpack.c.l.bf16 %v83
    %v88 = vunpack.c.l.bf16 %v84
    %v89 = vunpack.c.l.bf16 %v85
    %v90 = vunpack.c.l.bf16 %v86
    %v91 = vsub.f32 %v63, %v87
    %v92 = vsub.f32 %v64, %v88
    %v93 = vsub.f32 %v65, %v89
    %v94 = vsub.f32 %v66, %v90
    %v95 = vpack.c.bf16 %v92, %v91
    %v96 = vpack.c.bf16 %v94, %v93
    %v113 = vunpack.c.l.b16 %v67
    %v114 = vunpack.c.l.b16 %v68
    %v115 = vunpack.c.l.b16 %v69
    %v116 = vunpack.c.l.b16 %v70
    %v117 = vunpack.c.l.b16 %v71
    %v118 = vunpack.c.l.b16 %v72
    %v119 = vunpack.c.l.b16 %v73
    %v120 = vunpack.c.l.b16 %v74
    %v121 = vunpack.c.l.b16 %v75
    %v122 = vunpack.c.l.b16 %v76
    %v123 = vunpack.c.l.b16 %v77
    %v124 = vunpack.c.l.b16 %v78
    %v125 = vunpack.c.l.b16 %v79
    %v126 = vunpack.c.l.b16 %v80
    %v127 = vunpack.c.l.b16 %v81
    %v128 = vunpack.c.l.b16 %v82
    %v129 = vpack.c.b16 %v114, %v113
    %v130 = vpack.c.b16 %v116, %v115
    %v131 = vpack.c.b16 %v118, %v117
    %v132 = vpack.c.b16 %v120, %v119
    %v133 = vpack.c.b16 %v122, %v121
    %v134 = vpack.c.b16 %v124, %v123
    %v135 = vpack.c.b16 %v126, %v125
    %v136 = vpack.c.b16 %v128, %v127
    %145 = vmatpush.bf16.msra.mxu0 %v136
    %146 = vmatpush.bf16.msra.mxu0 %v135
    %147 = vmatpush.bf16.msra.mxu0 %v134
    %148 = vmatpush.bf16.msra.mxu0 %v133
    %149 = vmatpush.bf16.msra.mxu0 %v132
    %150 = vmatpush.bf16.msra.mxu0 %v131
    %151 = vmatpush.bf16.msra.mxu0 %v130
    %152 = vmatpush.bf16.msra.mxu0 %v129
    %153 = vmatmul.bf16.gmra.mxu0 %v95
    %v154 = vpop.f32.mrf.mxu0
    %v155 = vadd.f32 0.0, %v154
    %v156 = vpop.f32.mrf.mxu0
    %v157 = vadd.f32 0.0, %v156
    %158 = vmatmul.bf16.gmra.mxu0 %v96
    %v159 = vpop.f32.mrf.mxu0
    %v160 = vadd.f32 0.0, %v159
    %v161 = vpop.f32.mrf.mxu0
    %v162 = vadd.f32 0.0, %v161
    %163 = vdwg.mxu0
    %v168 = vunpack.c.l.b16 %v83
    %v169 = vunpack.c.l.b16 %v84
    %v170 = vunpack.c.l.b16 %v85
    %v171 = vunpack.c.l.b16 %v86
    %v172 = vpack.c.b16 %v169, %v168
    %v173 = vpack.c.b16 %v171, %v170
    %176 = vmatpush.bf16.msra.mxu0 %v136
    %177 = vmatpush.bf16.msra.mxu0 %v135
    %178 = vmatpush.bf16.msra.mxu0 %v134
    %179 = vmatpush.bf16.msra.mxu0 %v133
    %180 = vmatpush.bf16.msra.mxu0 %v132
    %181 = vmatpush.bf16.msra.mxu0 %v131
    %182 = vmatpush.bf16.msra.mxu0 %v130
    %183 = vmatpush.bf16.msra.mxu0 %v129
    %184 = vmatmul.bf16.gmra.mxu0 %v172
    %v185 = vpop.f32.mrf.mxu0
    %v186 = vadd.f32 %v155, %v185
    %v187 = vpop.f32.mrf.mxu0
    %v188 = vadd.f32 %v157, %v187
    %189 = vmatmul.bf16.gmra.mxu0 %v173
    %v190 = vpop.f32.mrf.mxu0
    %v191 = vadd.f32 %v160, %v190
    %v192 = vpop.f32.mrf.mxu0
    %v193 = vadd.f32 %v162, %v192
    %194 = vdwg.mxu0
    %v195 = vsub.f32 %v63, %v186
    %v196 = vsub.f32 %v64, %v188
    %v197 = vsub.f32 %v65, %v191
    %v198 = vsub.f32 %v66, %v193
    %v199 = vmul.f32 %v195, %v195
    %v200 = vmul.f32 %v196, %v196
    %v201 = vmul.f32 %v197, %v197
    %v202 = vmul.f32 %v198, %v198
    %v203 = vpack.c.bf16 %v199, %v199
    %v204 = vpack.c.bf16 %v200, %v200
    %v205 = vpack.c.bf16 %v201, %v201
    %v206 = vpack.c.bf16 %v202, %v202
    %v207 = vunpack.c.l.bf16 %v203
    %v208 = vunpack.c.l.bf16 %v204
    %v209 = vunpack.c.l.bf16 %v205
    %v210 = vunpack.c.l.bf16 %v206
    %v211 = vsub.f32 %v199, %v207
    %v212 = vsub.f32 %v200, %v208
    %v213 = vsub.f32 %v201, %v209
    %v214 = vsub.f32 %v202, %v210
    %v215 = vpack.c.bf16 %v212, %v211
    %v216 = vpack.c.bf16 %v214, %v213
    %217 = vmatpush.bf16.msra.mxu0 %v136
    %218 = vmatpush.bf16.msra.mxu0 %v135
    %219 = vmatpush.bf16.msra.mxu0 %v134
    %220 = vmatpush.bf16.msra.mxu0 %v133
    %221 = vmatpush.bf16.msra.mxu0 %v132
    %222 = vmatpush.bf16.msra.mxu0 %v131
    %223 = vmatpush.bf16.msra.mxu0 %v130
    %224 = vmatpush.bf16.msra.mxu0 %v129
    %225 = vmatmul.bf16.gmra.mxu0 %v215
    %v226 = vpop.f32.mrf.mxu0
    %v227 = vadd.f32 0.0, %v226
    %v228 = vpop.f32.mrf.mxu0
    %v229 = vadd.f32 0.0, %v228
    %230 = vmatmul.bf16.gmra.mxu0 %v216
    %v231 = vpop.f32.mrf.mxu0
    %v232 = vadd.f32 0.0, %v231
    %v233 = vpop.f32.mrf.mxu0
    %v234 = vadd.f32 0.0, %v233
    %235 = vdwg.mxu0
    %v240 = vunpack.c.l.b16 %v203
    %v241 = vunpack.c.l.b16 %v204
    %v242 = vunpack.c.l.b16 %v205
    %v243 = vunpack.c.l.b16 %v206
    %v244 = vpack.c.b16 %v241, %v240
    %v245 = vpack.c.b16 %v243, %v242
    %248 = vmatpush.bf16.msra.mxu0 %v136
    %249 = vmatpush.bf16.msra.mxu0 %v135
    %250 = vmatpush.bf16.msra.mxu0 %v134
    %251 = vmatpush.bf16.msra.mxu0 %v133
    %252 = vmatpush.bf16.msra.mxu0 %v132
    %253 = vmatpush.bf16.msra.mxu0 %v131
    %254 = vmatpush.bf16.msra.mxu0 %v130
    %255 = vmatpush.bf16.msra.mxu0 %v129
    %256 = vmatmul.bf16.gmra.mxu0 %v244
    %v257 = vpop.f32.mrf.mxu0
    %v258 = vadd.f32 %v227, %v257
    %v259 = vpop.f32.mrf.mxu0
    %v260 = vadd.f32 %v229, %v259
    %261 = vmatmul.bf16.gmra.mxu0 %v245
    %v262 = vpop.f32.mrf.mxu0
    %v263 = vadd.f32 %v232, %v262
    %v264 = vpop.f32.mrf.mxu0
    %v265 = vadd.f32 %v234, %v264
    %266 = vdwg.mxu0
    %v267 = vmax.f32 %v258, 0.0
    %v268 = vmax.f32 %v260, 0.0
    %v269 = vmax.f32 %v263, 0.0
    %v270 = vmax.f32 %v265, 0.0
    %v271 = vadd.f32 %v267, 1e-05
    %v272 = vadd.f32 %v268, 1e-05
    %v273 = vadd.f32 %v269, 1e-05
    %v274 = vadd.f32 %v270, 1e-05
    %v275 = vrsqrt.pop %v271
    %v276 = vmul.f32 %v275, %v271
    %v277 = vmul.f32 %v276, %v275
    %v278 = vmul.f32 0.5, %v277
    %v279 = vsub.f32 1.5, %v278
    %v280 = vmul.f32 %v275, %v279
    %vm281 = vweird.f32 %v271
    %vm282 = vweird.f32 %v275
    %vm283 = vmor %vm281, %vm282
    %v284 = vsel %vm283, %v275, %v280
    %v285 = vrsqrt.pop %v272
    %v286 = vmul.f32 %v285, %v272
    %v287 = vmul.f32 %v286, %v285
    %v288 = vmul.f32 0.5, %v287
    %v289 = vsub.f32 1.5, %v288
    %v290 = vmul.f32 %v285, %v289
    %vm291 = vweird.f32 %v272
    %vm292 = vweird.f32 %v285
    %vm293 = vmor %vm291, %vm292
    %v294 = vsel %vm293, %v285, %v290
    %v295 = vrsqrt.pop %v273
    %v296 = vmul.f32 %v295, %v273
    %v297 = vmul.f32 %v296, %v295
    %v298 = vmul.f32 0.5, %v297
    %v299 = vsub.f32 1.5, %v298
    %v300 = vmul.f32 %v295, %v299
    %vm301 = vweird.f32 %v273
    %vm302 = vweird.f32 %v295
    %vm303 = vmor %vm301, %vm302
    %v304 = vsel %vm303, %v295, %v300
    %v305 = vrsqrt.pop %v274
    %v306 = vmul.f32 %v305, %v274
    %v307 = vmul.f32 %v306, %v305
    %v308 = vmul.f32 0.5, %v307
    %v309 = vsub.f32 1.5, %v308
    %v310 = vmul.f32 %v305, %v309
    %vm311 = vweird.f32 %v274
    %vm312 = vweird.f32 %v305
    %vm313 = vmor %vm311, %vm312
    %v314 = vsel %vm313, %v305, %v310
    %v315 = vmul.f32 %v195, %v284
    %v316 = vmul.f32 %v196, %v294
    %v317 = vmul.f32 %v197, %v304
    %v318 = vmul.f32 %v198, %v314
    %v319 = vld [vmem:[#allocation5] sm:$0x1]
    %v321 = vperm.slane %v319, 0
    %v323 = vmul.f32 %v315, %v321
    %v324 = vmul.f32 %v316, %v321
    %v325 = vmul.f32 %v317, %v321
    %v326 = vmul.f32 %v318, %v321
    %v327 = vld [vmem:[%s2] sm:$0x1]
    %v329 = vperm.slane %v327, 0
    %v331 = vadd.f32 %v323, %v329
    %v332 = vadd.f32 %v324, %v329
    %v333 = vadd.f32 %v325, %v329
    %v334 = vadd.f32 %v326, %v329
    %335 = vst [vmem:[#allocation8] sm:$0xff] %v331
    %336 = vst [vmem:[#allocation8 + $0x8] sm:$0xff] %v332
    %337 = vst [vmem:[#allocation8 + $0x10] sm:$0xff] %v333
    %338 = vst [vmem:[#allocation8 + $0x18] sm:$0xff] %v334
    // Predicated region
    $region30: #{tpu_custom_call.1} parent=1 // pred_check
      _
    $region31: #{tpu_custom_call.1} parent=1 // pred_check_branch
      %340 = sbr.rel (0) target = $region33
    $region32: #{tpu_custom_call.1} parent=1 // pred_region
      %342 = vsyncadd [#allocation4], 0
      %s343 = sshll.u32 [#allocation8], 4
      %s344 = int_to_ptr.vmem [resolvable:$true] %s343
      %s345 = sshll.u32 %s4, 4
      %s346 = int_to_ptr.hbm [resolvable:$true] %s345
      %351 = dma.vmem_to_hbm [thread:$0]  %s344, 512, %s346, [#allocation4], 128, 128, 8
    $region33: #{tpu_custom_call.1} parent=1 // pred_fallthru
      _
    // Predicated region
    $region34: #{tpu_custom_call.1} parent=1 // pred_check
      _
    $region35: #{tpu_custom_call.1} parent=1 // pred_check_branch
      %353 = sbr.rel (0) target = $region37
    $region36: #{tpu_custom_call.1} parent=1 // pred_region
      %355 = dma.done [#allocation4], 512
    $region37: #{tpu_custom_call.1} parent=1 // pred_fallthru
      _
    %356 = vsyncpa [#allocation3], 1
    %357 = vsyncpa [#allocation6], 1
    %358 = vsyncpa [#allocation4], 1

</llo_original>
